<compile_context>
chip_gen: v7x
topology: tpu7x:2x2x1
jax: 0.10.0
libtpu: 0.0.40
codegen_flags: <defaults>
</compile_context>

<pallas_src>
import functools

import jax
import jax.numpy as jnp
from jax.experimental import pallas as pl
from jax.experimental.pallas import tpu as pltpu

LANE = 128
SUBLANE = 8


def _ru(x, m):
    return ((x + m - 1) // m) * m


def _pad_to(a, shape):
    pads = [(0, t - s) for s, t in zip(a.shape, shape)]
    if all(p == (0, 0) for p in pads):
        return a
    return jnp.pad(a, pads)


# ----------------------------------------------------------------------------
# Fused decoder-step kernel
# ----------------------------------------------------------------------------
def _decoder_step_kernel(ids_ref, h_ref, emb_ref, wx_ref, wh_ref, bf_ref,
                         bhn_ref, fcw_ref, fcb_ref, pred_ref, hout_ref,
                         *, hidden_dim):
    """One full decoder step, all layers fused.

    ids_ref : (B, 1)       int32 token ids
    h_ref   : (L, B, D)    previous hidden states (D = 128-padded feature dim)
    emb_ref : (Vp, D)      embedding table, bf16, zero-padded
    wx_ref  : (L, D, Gp)   W_ih^T, bf16, gate axis padded to Gp = ru(3H,128)
    wh_ref  : (L, D, Gp)   W_hh^T, bf16, same layout
    bf_ref  : (L, 1, Gp)   folded bias f32 [b_ir+b_hr | b_iz+b_hz | b_in]
    bhn_ref : (L, 1, D)    b_hn f32 (must stay inside the r*(...) term)
    fcw_ref : (D, Op)      fc_out weight, bf16, transposed + padded
    fcb_ref : (1, Op)      fc_out bias, f32, padded
    pred_ref: (B, Op)      prediction (lane-dense, sliced in wrapper)
    hout_ref: (L, B, D)    new hidden states (aliased with h_ref's HBM buffer)
    """
    B = ids_ref.shape[0]
    Vp = emb_ref.shape[0]
    L, _, D = h_ref.shape
    H = hidden_dim

    # Embedding gather as one-hot @ table on the MXU (no HBM round trip of the
    # embedded activations).
    ids = ids_ref[...]                                            # (B, 1) int32
    cols = jax.lax.broadcasted_iota(jnp.int32, (B, Vp), 1)
    one_hot = (cols == ids).astype(jnp.bfloat16)                  # (B, Vp) bf16
    x = jnp.dot(one_hot, emb_ref[...],
                preferred_element_type=jnp.float32)               # (B, D) f32

    # num_layers is small and static -> unrolled Python loop.
    for layer in range(L):
        h = h_ref[layer]                                          # (B, D) f32
        gi = jnp.dot(x.astype(jnp.bfloat16), wx_ref[layer],
                     preferred_element_type=jnp.float32) + bf_ref[layer]
        gh = jnp.dot(h.astype(jnp.bfloat16), wh_ref[layer],
                     preferred_element_type=jnp.float32)          # (B, Gp) f32
        # Gate slices live at lane offsets 0 / H / 2H (tight packing).
        r = jax.nn.sigmoid(gi[:, 0:H] + gh[:, 0:H])
        z = jax.nn.sigmoid(gi[:, H:2 * H] + gh[:, H:2 * H])
        n = jnp.tanh(gi[:, 2 * H:3 * H]
                     + r * (gh[:, 2 * H:3 * H] + bhn_ref[layer][:, :H]))
        h_new = (1.0 - z) * n + z * h[:, :H]                      # (B, H) f32
        if H < D:
            # Re-establish the zero lane padding so the next layer's matmul and
            # the aliased hidden write stay well defined.
            h_new = jnp.concatenate(
                [h_new, jnp.zeros((B, D - H), jnp.float32)], axis=-1)
        hout_ref[layer] = h_new
        x = h_new                                                 # input to next layer

    pred_ref[...] = (jnp.dot(x.astype(jnp.bfloat16), fcw_ref[...],
                             preferred_element_type=jnp.float32) + fcb_ref[...])


_VMEM = pl.BlockSpec(memory_space=pltpu.MemorySpace.VMEM)


@functools.partial(jax.jit, static_argnames=("hidden_dim",), donate_argnums=(2,))
def decoder_step(packed, ids2d, h_pad, *, hidden_dim):
    """Single fused decode step on padded buffers.

    ids2d : (Bp, 1) int32
    h_pad : (L, Bp, D) f32, donated & updated in place (lane/row padding may
            hold bounded garbage after the first step; it is never read back
            meaningfully).
    Returns (pred_padded (Bp, Op) f32, new h_pad (L, Bp, D) f32).
    """
    L, Bp, D = h_pad.shape
    Op = packed["fcw"].shape[1]
    kernel = functools.partial(_decoder_step_kernel, hidden_dim=hidden_dim)
    return pl.pallas_call(
        kernel,
        out_shape=(jax.ShapeDtypeStruct((Bp, Op), jnp.float32),
                   jax.ShapeDtypeStruct((L, Bp, D), jnp.float32)),
        in_specs=[_VMEM] * 9,
        out_specs=(_VMEM, _VMEM),
        input_output_aliases={1: 1},   # hidden state updated in place
    )(ids2d, h_pad, packed["emb"], packed["wx"], packed["wh"],
      packed["bf"], packed["bhn"], packed["fcw"], packed["fcb"])


# ----------------------------------------------------------------------------
# Host-side parameter packing (transpose / pad / fold biases / bf16 / stack)
# ----------------------------------------------------------------------------
def pack_params(params):
    emb = params["embedding"]                       # (V, E)
    V, E = emb.shape
    H = params["w_hh"][0].shape[1]
    O = params["fc_w"].shape[0]
    L = len(params["w_ih"])

    D = max(_ru(E, LANE), _ru(H, LANE))             # padded feature width
    Gp = _ru(3 * H, LANE)                           # tight gate-axis padding
    Vp = _ru(V, LANE)
    Op = _ru(O, LANE)

    wx, wh, bf, bhn = [], [], [], []
    for l in range(L):
        # PyTorch layout (3H, in), rows ordered [r; z; n] -> transpose + pad.
        wx.append(_pad_to(params["w_ih"][l].T, (D, Gp)).astype(jnp.bfloat16))
        wh.append(_pad_to(params["w_hh"][l].T, (D, Gp)).astype(jnp.bfloat16))
        b_i, b_h = params["b_ih"][l], params["b_hh"][l]
        # Fold b_ih + b_hh for r/z; keep b_in alone (b_hn must stay inside r*(...)).
        folded = jnp.concatenate([b_i[:2 * H] + b_h[:2 * H], b_i[2 * H:]])
        bf.append(_pad_to(folded, (Gp,))[None, :])              # (1, Gp) f32
        bhn.append(_pad_to(b_h[2 * H:], (D,))[None, :])         # (1, D)  f32

    return {
        "emb": _pad_to(emb, (Vp, D)).astype(jnp.bfloat16),
        "wx": jnp.stack(wx, axis=0),                # (L, D, Gp) bf16
        "wh": jnp.stack(wh, axis=0),                # (L, D, Gp) bf16
        "bf": jnp.stack(bf, axis=0),                # (L, 1, Gp) f32
        "bhn": jnp.stack(bhn, axis=0),              # (L, 1, D)  f32
        "fcw": _pad_to(params["fc_w"].T, (D, Op)).astype(jnp.bfloat16),
        "fcb": _pad_to(params["fc_b"], (Op,))[None, :],          # (1, Op) f32
    }


# ----------------------------------------------------------------------------
# Convenience wrapper matching the PyTorch forward signature (pads once,
# slices once; a decode loop should carry the padded hidden via decoder_step).
# ----------------------------------------------------------------------------
def decoder_forward(packed, input_char, hidden, *, output_dim):
    """input_char: (B,) int32;  hidden: (num_layers, B, H) fp32.

    Returns (prediction (B, output_dim), new_hidden (num_layers, B, H)).
    """
    L, B, H = hidden.shape
    D = packed["wx"].shape[1]
    Bp = _ru(B, SUBLANE)

    ids2d = _pad_to(input_char.astype(jnp.int32)[:, None], (Bp, 1))
    h_pad = _pad_to(hidden.astype(jnp.float32), (L, Bp, D))

    pred_p, h_new_p = decoder_step(packed, ids2d, h_pad, hidden_dim=H)
    return pred_p[:B, :output_dim], h_new_p[:, :B, :H]


# ----------------------------------------------------------------------------
# Pure-JAX reference (PyTorch GRU math) for a correctness check
# ----------------------------------------------------------------------------
def decoder_reference(params, input_char, hidden):
    x = jnp.take(params["embedding"], input_char, axis=0)
    H = hidden.shape[2]
    new_h = []
    for l in range(hidden.shape[0]):
        h = hidden[l]
        gi = x @ params["w_ih"][l].T + params["b_ih"][l]
        gh = h @ params["w_hh"][l].T + params["b_hh"][l]
        r = jax.nn.sigmoid(gi[:, :H] + gh[:, :H])
        z = jax.nn.sigmoid(gi[:, H:2 * H] + gh[:, H:2 * H])
        n = jnp.tanh(gi[:, 2 * H:] + r * gh[:, 2 * H:])
        h = (1.0 - z) * n + z * h
        new_h.append(h)
        x = h
    pred = x @ params["fc_w"].T + params["fc_b"]
    return pred, jnp.stack(new_h, axis=0)


# ----------------------------------------------------------------------------
# Deterministic parameter init (PyTorch layouts, shapes per nn.Module __init__)
# ----------------------------------------------------------------------------
def init_params(key, output_dim, emb_dim, hidden_dim, num_layers):
    ks = jax.random.split(key, 4 + num_layers)
    bound = 1.0 / jnp.sqrt(hidden_dim)

    params = {
        "embedding": jax.random.normal(ks[0], (output_dim, emb_dim), jnp.float32),
        "fc_w": jax.random.uniform(ks[1], (output_dim, hidden_dim), jnp.float32,
                                   -bound, bound),
        "fc_b": jax.random.uniform(ks[2], (output_dim,), jnp.float32, -bound, bound),
        "w_ih": [], "w_hh": [], "b_ih": [], "b_hh": [],
    }
    for layer in range(num_layers):
        in_dim = emb_dim if layer == 0 else hidden_dim
        k0, k1, k2, k3 = jax.random.split(ks[4 + layer], 4)
        params["w_ih"].append(
            jax.random.uniform(k0, (3 * hidden_dim, in_dim), jnp.float32, -bound, bound))
        params["w_hh"].append(
            jax.random.uniform(k1, (3 * hidden_dim, hidden_dim), jnp.float32, -bound, bound))
        params["b_ih"].append(
            jax.random.uniform(k2, (3 * hidden_dim,), jnp.float32, -bound, bound))
        params["b_hh"].append(
            jax.random.uniform(k3, (3 * hidden_dim,), jnp.float32, -bound, bound))
    return params


if __name__ == "__main__":
    OUTPUT_DIM = 16     # vocab size
    EMB_DIM = 32
    HIDDEN_DIM = 32
    NUM_LAYERS = 2
    BATCH = 8
    # cell_type = "GRU", dropout = 0.0

    key = jax.random.PRNGKey(0)
    k_par, k_tok, k_hid = jax.random.split(key, 3)

    params = init_params(k_par, OUTPUT_DIM, EMB_DIM, HIDDEN_DIM, NUM_LAYERS)
    packed = pack_params(params)

    input_char = jax.random.randint(k_tok, (BATCH,), 0, OUTPUT_DIM, jnp.int32)
    hidden = jax.random.normal(k_hid, (NUM_LAYERS, BATCH, HIDDEN_DIM), jnp.float32)

    prediction, new_hidden = decoder_forward(packed, input_char, hidden,
                                             output_dim=OUTPUT_DIM)
    jax.block_until_ready((prediction, new_hidden))

    assert prediction.shape == (BATCH, OUTPUT_DIM)
    assert new_hidden.shape == (NUM_LAYERS, BATCH, HIDDEN_DIM)

    # Pure-JAX f32 reference check (tolerance covers bf16 weights + MXU f32 acc).
    pred_ref, hid_ref = decoder_reference(params, input_char, hidden)
    assert jnp.allclose(prediction, pred_ref, atol=5e-2, rtol=5e-2), \
        float(jnp.max(jnp.abs(prediction - pred_ref)))
    assert jnp.allclose(new_hidden, hid_ref, atol=5e-2, rtol=5e-2), \
        float(jnp.max(jnp.abs(new_hidden - hid_ref)))

    print("KERNEL_OK")
</pallas_src>

<mosaic_0001>
module attributes {stable_mosaic.version = 11 : i64} {
  func.func @_decoder_step_kernel(%arg0: memref<8x1xi32, #tpu.memory_space<vmem>>, %arg1: memref<2x8x128xf32, #tpu.memory_space<vmem>>, %arg2: memref<128x128xbf16, #tpu.memory_space<vmem>>, %arg3: memref<2x128x128xbf16, #tpu.memory_space<vmem>>, %arg4: memref<2x128x128xbf16, #tpu.memory_space<vmem>>, %arg5: memref<2x1x128xf32, #tpu.memory_space<vmem>>, %arg6: memref<2x1x128xf32, #tpu.memory_space<vmem>>, %arg7: memref<128x128xbf16, #tpu.memory_space<vmem>>, %arg8: memref<1x128xf32, #tpu.memory_space<vmem>>, %arg9: memref<8x128xf32, #tpu.memory_space<vmem>>, %arg10: memref<2x8x128xf32, #tpu.memory_space<vmem>>) attributes {dimension_semantics = [], scalar_prefetch = 0 : i64, scratch_operands = 0 : i64, tpu.core_type = #tpu.core_type<tc>} {
    %c0 = arith.constant 0 : index
    %c0_0 = arith.constant 0 : index
    %0 = vector.load %arg0[%c0, %c0_0] : memref<8x1xi32, #tpu.memory_space<vmem>>, vector<8x1xi32>
    %1 = tpu.iota {dimensions = array<i32: 1>} : vector<8x128xi32>
    %2 = vector.broadcast %0 : vector<8x1xi32> to vector<8x128xi32>
    %3 = arith.cmpi eq, %1, %2 : vector<8x128xi32>
    %4 = arith.extui %3 : vector<8x128xi1> to vector<8x128xi32>
    %5 = arith.sitofp %4 : vector<8x128xi32> to vector<8x128xf32>
    %6 = arith.truncf %5 : vector<8x128xf32> to vector<8x128xbf16>
    %c0_1 = arith.constant 0 : index
    %c0_2 = arith.constant 0 : index
    %7 = vector.load %arg2[%c0_1, %c0_2] : memref<128x128xbf16, #tpu.memory_space<vmem>>, vector<128x128xbf16>
    %cst = arith.constant dense<0.000000e+00> : vector<8x128xf32>
    %8 = tpu.matmul %6, %7, %cst {dimension_numbers = #tpu.dot_dimension_numbers<[1], [0], [0], [1], [0, 0, 1, 1], [], []>} : vector<8x128xbf16>, vector<128x128xbf16>, vector<8x128xf32> -> vector<8x128xf32>
    %c0_3 = arith.constant 0 : index
    %c0_4 = arith.constant 0 : index
    %c0_5 = arith.constant 0 : index
    %9 = vector.load %arg1[%c0_3, %c0_4, %c0_5] : memref<2x8x128xf32, #tpu.memory_space<vmem>>, vector<1x8x128xf32>
    %10 = vector.shape_cast %9 : vector<1x8x128xf32> to vector<8x128xf32>
    %11 = arith.truncf %8 : vector<8x128xf32> to vector<8x128xbf16>
    %c0_6 = arith.constant 0 : index
    %c0_7 = arith.constant 0 : index
    %c0_8 = arith.constant 0 : index
    %12 = vector.load %arg3[%c0_6, %c0_7, %c0_8] : memref<2x128x128xbf16, #tpu.memory_space<vmem>>, vector<1x128x128xbf16>
    %13 = vector.shape_cast %12 : vector<1x128x128xbf16> to vector<128x128xbf16>
    %cst_9 = arith.constant dense<0.000000e+00> : vector<8x128xf32>
    %14 = tpu.matmul %11, %13, %cst_9 {dimension_numbers = #tpu.dot_dimension_numbers<[1], [0], [0], [1], [0, 0, 1, 1], [], []>} : vector<8x128xbf16>, vector<128x128xbf16>, vector<8x128xf32> -> vector<8x128xf32>
    %c0_10 = arith.constant 0 : index
    %c0_11 = arith.constant 0 : index
    %c0_12 = arith.constant 0 : index
    %15 = vector.load %arg5[%c0_10, %c0_11, %c0_12] : memref<2x1x128xf32, #tpu.memory_space<vmem>>, vector<1x1x128xf32>
    %16 = vector.shape_cast %15 : vector<1x1x128xf32> to vector<1x128xf32>
    %17 = vector.broadcast %16 : vector<1x128xf32> to vector<8x128xf32>
    %18 = arith.addf %14, %17 : vector<8x128xf32>
    %19 = arith.truncf %10 : vector<8x128xf32> to vector<8x128xbf16>
    %c0_13 = arith.constant 0 : index
    %c0_14 = arith.constant 0 : index
    %c0_15 = arith.constant 0 : index
    %20 = vector.load %arg4[%c0_13, %c0_14, %c0_15] : memref<2x128x128xbf16, #tpu.memory_space<vmem>>, vector<1x128x128xbf16>
    %21 = vector.shape_cast %20 : vector<1x128x128xbf16> to vector<128x128xbf16>
    %cst_16 = arith.constant dense<0.000000e+00> : vector<8x128xf32>
    %22 = tpu.matmul %19, %21, %cst_16 {dimension_numbers = #tpu.dot_dimension_numbers<[1], [0], [0], [1], [0, 0, 1, 1], [], []>} : vector<8x128xbf16>, vector<128x128xbf16>, vector<8x128xf32> -> vector<8x128xf32>
    %23 = vector.extract_strided_slice %18 {offsets = [0, 0], sizes = [8, 32], strides = [1, 1]} : vector<8x128xf32> to vector<8x32xf32>
    %24 = vector.extract_strided_slice %22 {offsets = [0, 0], sizes = [8, 32], strides = [1, 1]} : vector<8x128xf32> to vector<8x32xf32>
    %25 = arith.addf %23, %24 : vector<8x32xf32>
    %26 = arith.negf %25 : vector<8x32xf32>
    %27 = math.exp %26 : vector<8x32xf32>
    %cst_17 = arith.constant 1.000000e+00 : f32
    %28 = vector.broadcast %cst_17 : f32 to vector<8x32xf32>
    %29 = arith.addf %28, %27 : vector<8x32xf32>
    %30 = arith.divf %28, %29 : vector<8x32xf32>
    %31 = vector.extract_strided_slice %18 {offsets = [0, 32], sizes = [8, 32], strides = [1, 1]} : vector<8x128xf32> to vector<8x32xf32>
    %32 = vector.extract_strided_slice %22 {offsets = [0, 32], sizes = [8, 32], strides = [1, 1]} : vector<8x128xf32> to vector<8x32xf32>
    %33 = arith.addf %31, %32 : vector<8x32xf32>
    %34 = arith.negf %33 : vector<8x32xf32>
    %35 = math.exp %34 : vector<8x32xf32>
    %cst_18 = arith.constant 1.000000e+00 : f32
    %36 = vector.broadcast %cst_18 : f32 to vector<8x32xf32>
    %37 = arith.addf %36, %35 : vector<8x32xf32>
    %38 = arith.divf %36, %37 : vector<8x32xf32>
    %39 = vector.extract_strided_slice %18 {offsets = [0, 64], sizes = [8, 32], strides = [1, 1]} : vector<8x128xf32> to vector<8x32xf32>
    %40 = vector.extract_strided_slice %22 {offsets = [0, 64], sizes = [8, 32], strides = [1, 1]} : vector<8x128xf32> to vector<8x32xf32>
    %c0_19 = arith.constant 0 : index
    %c0_20 = arith.constant 0 : index
    %c0_21 = arith.constant 0 : index
    %41 = vector.load %arg6[%c0_19, %c0_20, %c0_21] : memref<2x1x128xf32, #tpu.memory_space<vmem>>, vector<1x1x128xf32>
    %42 = vector.shape_cast %41 : vector<1x1x128xf32> to vector<1x128xf32>
    %43 = vector.extract_strided_slice %42 {offsets = [0, 0], sizes = [1, 32], strides = [1, 1]} : vector<1x128xf32> to vector<1x32xf32>
    %44 = vector.broadcast %43 : vector<1x32xf32> to vector<8x32xf32>
    %45 = arith.addf %40, %44 : vector<8x32xf32>
    %46 = arith.mulf %30, %45 : vector<8x32xf32>
    %47 = arith.addf %39, %46 : vector<8x32xf32>
    %48 = math.tanh %47 : vector<8x32xf32>
    %cst_22 = arith.constant 1.000000e+00 : f32
    %49 = vector.broadcast %cst_22 : f32 to vector<8x32xf32>
    %50 = arith.subf %49, %38 : vector<8x32xf32>
    %51 = arith.mulf %50, %48 : vector<8x32xf32>
    %52 = vector.extract_strided_slice %10 {offsets = [0, 0], sizes = [8, 32], strides = [1, 1]} : vector<8x128xf32> to vector<8x32xf32>
    %53 = arith.mulf %38, %52 : vector<8x32xf32>
    %54 = arith.addf %51, %53 : vector<8x32xf32>
    %cst_23 = arith.constant 0.000000e+00 : f32
    %55 = vector.broadcast %cst_23 : f32 to vector<8x96xf32>
    %56 = tpu.concatenate %54, %55 in 1 : vector<8x32xf32>, vector<8x96xf32> -> vector<8x128xf32>
    %c0_24 = arith.constant 0 : index
    %c0_25 = arith.constant 0 : index
    %c0_26 = arith.constant 0 : index
    %57 = vector.load %arg10[%c0_24, %c0_25, %c0_26] : memref<2x8x128xf32, #tpu.memory_space<vmem>>, vector<1x8x128xf32>
    %58 = vector.shape_cast %57 : vector<1x8x128xf32> to vector<8x128xf32>
    %59 = vector.shape_cast %56 : vector<8x128xf32> to vector<1x8x128xf32>
    tpu.vector_store %arg10[%c0_24, %c0_25, %c0_26], %59 {strides = array<i32>} : memref<2x8x128xf32, #tpu.memory_space<vmem>>, vector<1x8x128xf32>,
    %c1 = arith.constant 1 : index
    %c0_27 = arith.constant 0 : index
    %c0_28 = arith.constant 0 : index
    %60 = vector.load %arg1[%c1, %c0_27, %c0_28] : memref<2x8x128xf32, #tpu.memory_space<vmem>>, vector<1x8x128xf32>
    %61 = vector.shape_cast %60 : vector<1x8x128xf32> to vector<8x128xf32>
    %62 = arith.truncf %56 : vector<8x128xf32> to vector<8x128xbf16>
    %c1_29 = arith.constant 1 : index
    %c0_30 = arith.constant 0 : index
    %c0_31 = arith.constant 0 : index
    %63 = vector.load %arg3[%c1_29, %c0_30, %c0_31] : memref<2x128x128xbf16, #tpu.memory_space<vmem>>, vector<1x128x128xbf16>
    %64 = vector.shape_cast %63 : vector<1x128x128xbf16> to vector<128x128xbf16>
    %cst_32 = arith.constant dense<0.000000e+00> : vector<8x128xf32>
    %65 = tpu.matmul %62, %64, %cst_32 {dimension_numbers = #tpu.dot_dimension_numbers<[1], [0], [0], [1], [0, 0, 1, 1], [], []>} : vector<8x128xbf16>, vector<128x128xbf16>, vector<8x128xf32> -> vector<8x128xf32>
    %c1_33 = arith.constant 1 : index
    %c0_34 = arith.constant 0 : index
    %c0_35 = arith.constant 0 : index
    %66 = vector.load %arg5[%c1_33, %c0_34, %c0_35] : memref<2x1x128xf32, #tpu.memory_space<vmem>>, vector<1x1x128xf32>
    %67 = vector.shape_cast %66 : vector<1x1x128xf32> to vector<1x128xf32>
    %68 = vector.broadcast %67 : vector<1x128xf32> to vector<8x128xf32>
    %69 = arith.addf %65, %68 : vector<8x128xf32>
    %70 = arith.truncf %61 : vector<8x128xf32> to vector<8x128xbf16>
    %c1_36 = arith.constant 1 : index
    %c0_37 = arith.constant 0 : index
    %c0_38 = arith.constant 0 : index
    %71 = vector.load %arg4[%c1_36, %c0_37, %c0_38] : memref<2x128x128xbf16, #tpu.memory_space<vmem>>, vector<1x128x128xbf16>
    %72 = vector.shape_cast %71 : vector<1x128x128xbf16> to vector<128x128xbf16>
    %cst_39 = arith.constant dense<0.000000e+00> : vector<8x128xf32>
    %73 = tpu.matmul %70, %72, %cst_39 {dimension_numbers = #tpu.dot_dimension_numbers<[1], [0], [0], [1], [0, 0, 1, 1], [], []>} : vector<8x128xbf16>, vector<128x128xbf16>, vector<8x128xf32> -> vector<8x128xf32>
    %74 = vector.extract_strided_slice %69 {offsets = [0, 0], sizes = [8, 32], strides = [1, 1]} : vector<8x128xf32> to vector<8x32xf32>
    %75 = vector.extract_strided_slice %73 {offsets = [0, 0], sizes = [8, 32], strides = [1, 1]} : vector<8x128xf32> to vector<8x32xf32>
    %76 = arith.addf %74, %75 : vector<8x32xf32>
    %77 = arith.negf %76 : vector<8x32xf32>
    %78 = math.exp %77 : vector<8x32xf32>
    %cst_40 = arith.constant 1.000000e+00 : f32
    %79 = vector.broadcast %cst_40 : f32 to vector<8x32xf32>
    %80 = arith.addf %79, %78 : vector<8x32xf32>
    %81 = arith.divf %79, %80 : vector<8x32xf32>
    %82 = vector.extract_strided_slice %69 {offsets = [0, 32], sizes = [8, 32], strides = [1, 1]} : vector<8x128xf32> to vector<8x32xf32>
    %83 = vector.extract_strided_slice %73 {offsets = [0, 32], sizes = [8, 32], strides = [1, 1]} : vector<8x128xf32> to vector<8x32xf32>
    %84 = arith.addf %82, %83 : vector<8x32xf32>
    %85 = arith.negf %84 : vector<8x32xf32>
    %86 = math.exp %85 : vector<8x32xf32>
    %cst_41 = arith.constant 1.000000e+00 : f32
    %87 = vector.broadcast %cst_41 : f32 to vector<8x32xf32>
    %88 = arith.addf %87, %86 : vector<8x32xf32>
    %89 = arith.divf %87, %88 : vector<8x32xf32>
    %90 = vector.extract_strided_slice %69 {offsets = [0, 64], sizes = [8, 32], strides = [1, 1]} : vector<8x128xf32> to vector<8x32xf32>
    %91 = vector.extract_strided_slice %73 {offsets = [0, 64], sizes = [8, 32], strides = [1, 1]} : vector<8x128xf32> to vector<8x32xf32>
    %c1_42 = arith.constant 1 : index
    %c0_43 = arith.constant 0 : index
    %c0_44 = arith.constant 0 : index
    %92 = vector.load %arg6[%c1_42, %c0_43, %c0_44] : memref<2x1x128xf32, #tpu.memory_space<vmem>>, vector<1x1x128xf32>
    %93 = vector.shape_cast %92 : vector<1x1x128xf32> to vector<1x128xf32>
    %94 = vector.extract_strided_slice %93 {offsets = [0, 0], sizes = [1, 32], strides = [1, 1]} : vector<1x128xf32> to vector<1x32xf32>
    %95 = vector.broadcast %94 : vector<1x32xf32> to vector<8x32xf32>
    %96 = arith.addf %91, %95 : vector<8x32xf32>
    %97 = arith.mulf %81, %96 : vector<8x32xf32>
    %98 = arith.addf %90, %97 : vector<8x32xf32>
    %99 = math.tanh %98 : vector<8x32xf32>
    %cst_45 = arith.constant 1.000000e+00 : f32
    %100 = vector.broadcast %cst_45 : f32 to vector<8x32xf32>
    %101 = arith.subf %100, %89 : vector<8x32xf32>
    %102 = arith.mulf %101, %99 : vector<8x32xf32>
    %103 = vector.extract_strided_slice %61 {offsets = [0, 0], sizes = [8, 32], strides = [1, 1]} : vector<8x128xf32> to vector<8x32xf32>
    %104 = arith.mulf %89, %103 : vector<8x32xf32>
    %105 = arith.addf %102, %104 : vector<8x32xf32>
    %cst_46 = arith.constant 0.000000e+00 : f32
    %106 = vector.broadcast %cst_46 : f32 to vector<8x96xf32>
    %107 = tpu.concatenate %105, %106 in 1 : vector<8x32xf32>, vector<8x96xf32> -> vector<8x128xf32>
    %c1_47 = arith.constant 1 : index
    %c0_48 = arith.constant 0 : index
    %c0_49 = arith.constant 0 : index
    %108 = vector.load %arg10[%c1_47, %c0_48, %c0_49] : memref<2x8x128xf32, #tpu.memory_space<vmem>>, vector<1x8x128xf32>
    %109 = vector.shape_cast %108 : vector<1x8x128xf32> to vector<8x128xf32>
    %110 = vector.shape_cast %107 : vector<8x128xf32> to vector<1x8x128xf32>
    tpu.vector_store %arg10[%c1_47, %c0_48, %c0_49], %110 {strides = array<i32>} : memref<2x8x128xf32, #tpu.memory_space<vmem>>, vector<1x8x128xf32>,
    %111 = arith.truncf %107 : vector<8x128xf32> to vector<8x128xbf16>
    %c0_50 = arith.constant 0 : index
    %c0_51 = arith.constant 0 : index
    %112 = vector.load %arg7[%c0_50, %c0_51] : memref<128x128xbf16, #tpu.memory_space<vmem>>, vector<128x128xbf16>
    %cst_52 = arith.constant dense<0.000000e+00> : vector<8x128xf32>
    %113 = tpu.matmul %111, %112, %cst_52 {dimension_numbers = #tpu.dot_dimension_numbers<[1], [0], [0], [1], [0, 0, 1, 1], [], []>} : vector<8x128xbf16>, vector<128x128xbf16>, vector<8x128xf32> -> vector<8x128xf32>
    %c0_53 = arith.constant 0 : index
    %c0_54 = arith.constant 0 : index
    %114 = vector.load %arg8[%c0_53, %c0_54] : memref<1x128xf32, #tpu.memory_space<vmem>>, vector<1x128xf32>
    %115 = vector.broadcast %114 : vector<1x128xf32> to vector<8x128xf32>
    %116 = arith.addf %113, %115 : vector<8x128xf32>
    %c0_55 = arith.constant 0 : index
    %c0_56 = arith.constant 0 : index
    %117 = vector.load %arg9[%c0_55, %c0_56] : memref<8x128xf32, #tpu.memory_space<vmem>>, vector<8x128xf32>
    tpu.vector_store %arg9[%c0_55, %c0_56], %116 {strides = array<i32>} : memref<8x128xf32, #tpu.memory_space<vmem>>, vector<8x128xf32>,
    return
  }
}

</mosaic_0001>

<llo_original>
// kernel: decoder_step.1
$region0: #{decoder_step.1}
  #allocation0 [shape = 'u32[]', space=smem, size = 0x4, offset = 0x4, fixed_abs, tag = 'smem constant byte address 0x4 - core index']
  #allocation1 [shape = 'u32[144,128]{1,0:T(1,128)}', space=vmem, size = 0x12000, scoped, tag = 'internal scratch']
  %s0 = inlined_call_operand.vmem [shape: s32[8,1], index: 0, kind: input, shape index: {}]
  %s1 = inlined_call_operand.hbm [shape: f32[2,8,128], index: 1, kind: input, shape index: {}, may-alias: {1,10}]
  %s2 = inlined_call_operand.hbm [shape: bf16[128,128], index: 2, kind: input, shape index: {}]
  %s3 = inlined_call_operand.hbm [shape: bf16[2,128,128], index: 3, kind: input, shape index: {}]
  %s4 = inlined_call_operand.hbm [shape: bf16[2,128,128], index: 4, kind: input, shape index: {}]
  %s5 = inlined_call_operand.vmem [shape: f32[2,1,128], index: 5, kind: input, shape index: {}]
  %s6 = inlined_call_operand.vmem [shape: f32[2,1,128], index: 6, kind: input, shape index: {}]
  %s7 = inlined_call_operand.hbm [shape: bf16[128,128], index: 7, kind: input, shape index: {}]
  %s8 = inlined_call_operand.vmem [shape: f32[1,128], index: 8, kind: input, shape index: {}]
  %s9 = inlined_call_operand.hbm [shape: f32[8,128], index: 9, kind: output, shape index: {0}]
  %s10 = inlined_call_operand.hbm [shape: f32[2,8,128], index: 10, kind: output, shape index: {1}, may-alias: {1,10}]
  %11 = xla_tuple %s9, %s10
  %s12 = sld [smem:[#allocation0]]
  $region74: #{decoder_step.1} parent=0
    _
  %s14 = ssub.s32 1, %s12
  %s15 = scalar_select 0, %s14, %s12
  $region1: #{decoder_step.1} parent=0
    #allocation2 [shape = 'u8[8192]{0}', space=vmem, size = 0x2000, scoped, tag = 'input window, operand 1, single buffered']
    #allocation3 [shape = 's32[1]{0}', space=sflag, size = 0x4, scoped, tag = 'scoped memory for decoder_step.1']
    #allocation4 [shape = 's32[1]{0}', space=sflag, size = 0x4, scoped, tag = 'scoped memory for decoder_step.1']
    #allocation5 [shape = 'u8[32768]{0}', space=vmem, size = 0x8000, scoped, tag = 'input window, operand 2, single buffered']
    #allocation6 [shape = 's32[1]{0}', space=sflag, size = 0x4, scoped, tag = 'scoped memory for decoder_step.1']
    #allocation7 [shape = 'u8[65536]{0}', space=vmem, size = 0x10000, scoped, tag = 'input window, operand 3, single buffered']
    #allocation8 [shape = 'u8[65536]{0}', space=vmem, size = 0x10000, scoped, tag = 'input window, operand 4, single buffered']
    #allocation9 [shape = 's32[1]{0}', space=sflag, size = 0x4, scoped, tag = 'scoped memory for decoder_step.1']
    #allocation10 [shape = 'u8[32768]{0}', space=vmem, size = 0x8000, scoped, tag = 'input window, operand 7, single buffered']
    #allocation11 [shape = 'u8[4096]{0}', space=vmem, size = 0x1000, scoped, tag = 'output window, operand 0, single buffered']
    #allocation12 [shape = 'u8[8192]{0}', space=vmem, size = 0x2000, scoped, tag = 'output window, operand 1, single buffered']
    #allocation13 [shape = 's32[1]{0}', space=sflag, size = 0x4, scoped, tag = 'scoped memory for decoder_step.1']
    %16 = vsyncpa [#allocation3], 0
    %17 = vsyncpa [#allocation6], 0
    %18 = vsyncpa [#allocation9], 0
    %19 = vsyncpa [#allocation4], 0
    %20 = vsyncpa [#allocation13], 0
    // Predicated region
    $region2: #{decoder_step.1} parent=1 // pred_check
      _
    $region3: #{decoder_step.1} parent=1 // pred_check_branch
      %22 = sbr.rel (0) target = $region5
    $region4: #{decoder_step.1} parent=1 // pred_region
      _
    $region5: #{decoder_step.1} parent=1 // pred_fallthru
      _
    // Predicated region
    $region6: #{decoder_step.1} parent=1 // pred_check
      _
    $region7: #{decoder_step.1} parent=1 // pred_check_branch
      %24 = sbr.rel (0) target = $region9
    $region8: #{decoder_step.1} parent=1 // pred_region
      %s26 = ssub.s32 256, 256
      %27 = vsyncadd [#allocation3], %s26
      %s28 = sshll.u32 [#allocation2], 4
      %s29 = int_to_ptr.vmem [resolvable:$true] %s28
      %34 = dma.hbm_to_vmem [thread:$0]  %s1, 256, %s29, [#allocation3], 128, 128, 8
    $region9: #{decoder_step.1} parent=1 // pred_fallthru
      _
    // Predicated region
    $region10: #{decoder_step.1} parent=1 // pred_check
      _
    $region11: #{decoder_step.1} parent=1 // pred_check_branch
      %36 = sbr.rel (0) target = $region13
    $region12: #{decoder_step.1} parent=1 // pred_region
      %s38 = ssub.s32 1024, 1024
      %39 = vsyncadd [#allocation6], %s38
      %s40 = sshll.u32 [#allocation5], 4
      %s41 = int_to_ptr.vmem [resolvable:$true] %s40
      %46 = dma.hbm_to_vmem [thread:$0]  %s2, 1024, %s41, [#allocation6], 64, 64, 4
    $region13: #{decoder_step.1} parent=1 // pred_fallthru
      _
    // Predicated region
    $region14: #{decoder_step.1} parent=1 // pred_check
      _
    $region15: #{decoder_step.1} parent=1 // pred_check_branch
      %48 = sbr.rel (0) target = $region17
    $region16: #{decoder_step.1} parent=1 // pred_region
      %s50 = ssub.s32 2048, 2048
      %51 = vsyncadd [#allocation6], %s50
      %s52 = sshll.u32 [#allocation7], 4
      %s53 = int_to_ptr.vmem [resolvable:$true] %s52
      %58 = dma.hbm_to_vmem [thread:$0]  %s3, 2048, %s53, [#allocation6], 64, 64, 4
    $region17: #{decoder_step.1} parent=1 // pred_fallthru
      _
    // Predicated region
    $region18: #{decoder_step.1} parent=1 // pred_check
      _
    $region19: #{decoder_step.1} parent=1 // pred_check_branch
      %60 = sbr.rel (0) target = $region21
    $region20: #{decoder_step.1} parent=1 // pred_region
      %s62 = ssub.s32 2048, 2048
      %63 = vsyncadd [#allocation9], %s62
      %s64 = sshll.u32 [#allocation8], 4
      %s65 = int_to_ptr.vmem [resolvable:$true] %s64
      %70 = dma.hbm_to_vmem [thread:$0]  %s4, 2048, %s65, [#allocation9], 64, 64, 4
    $region21: #{decoder_step.1} parent=1 // pred_fallthru
      _
    // Predicated region
    $region22: #{decoder_step.1} parent=1 // pred_check
      _
    $region23: #{decoder_step.1} parent=1 // pred_check_branch
      %72 = sbr.rel (0) target = $region25
    $region24: #{decoder_step.1} parent=1 // pred_region
      _
    $region25: #{decoder_step.1} parent=1 // pred_fallthru
      _
    // Predicated region
    $region26: #{decoder_step.1} parent=1 // pred_check
      _
    $region27: #{decoder_step.1} parent=1 // pred_check_branch
      %74 = sbr.rel (0) target = $region29
    $region28: #{decoder_step.1} parent=1 // pred_region
      _
    $region29: #{decoder_step.1} parent=1 // pred_fallthru
      _
    // Predicated region
    $region30: #{decoder_step.1} parent=1 // pred_check
      _
    $region31: #{decoder_step.1} parent=1 // pred_check_branch
      %76 = sbr.rel (0) target = $region33
    $region32: #{decoder_step.1} parent=1 // pred_region
      %s78 = ssub.s32 1024, 1024
      %79 = vsyncadd [#allocation9], %s78
      %s80 = sshll.u32 [#allocation10], 4
      %s81 = int_to_ptr.vmem [resolvable:$true] %s80
      %86 = dma.hbm_to_vmem [thread:$0]  %s7, 1024, %s81, [#allocation9], 64, 64, 4
    $region33: #{decoder_step.1} parent=1 // pred_fallthru
      _
    // Predicated region
    $region34: #{decoder_step.1} parent=1 // pred_check
      _
    $region35: #{decoder_step.1} parent=1 // pred_check_branch
      %88 = sbr.rel (0) target = $region37
    $region36: #{decoder_step.1} parent=1 // pred_region
      _
    $region37: #{decoder_step.1} parent=1 // pred_fallthru
      _
    // Predicated region
    $region38: #{decoder_step.1} parent=1 // pred_check
      _
    $region39: #{decoder_step.1} parent=1 // pred_check_branch
      %90 = sbr.rel (0) target = $region41
    $region40: #{decoder_step.1} parent=1 // pred_region
      %91 = dma.done [#allocation3], 256
    $region41: #{decoder_step.1} parent=1 // pred_fallthru
      _
    // Predicated region
    $region42: #{decoder_step.1} parent=1 // pred_check
      _
    $region43: #{decoder_step.1} parent=1 // pred_check_branch
      %93 = sbr.rel (0) target = $region45
    $region44: #{decoder_step.1} parent=1 // pred_region
      %94 = dma.done [#allocation6], 1024
    $region45: #{decoder_step.1} parent=1 // pred_fallthru
      _
    // Predicated region
    $region46: #{decoder_step.1} parent=1 // pred_check
      _
    $region47: #{decoder_step.1} parent=1 // pred_check_branch
      %96 = sbr.rel (0) target = $region49
    $region48: #{decoder_step.1} parent=1 // pred_region
      %97 = dma.done [#allocation6], 2048
    $region49: #{decoder_step.1} parent=1 // pred_fallthru
      _
    // Predicated region
    $region50: #{decoder_step.1} parent=1 // pred_check
      _
    $region51: #{decoder_step.1} parent=1 // pred_check_branch
      %99 = sbr.rel (0) target = $region53
    $region52: #{decoder_step.1} parent=1 // pred_region
      %100 = dma.done [#allocation9], 2048
    $region53: #{decoder_step.1} parent=1 // pred_fallthru
      _
    // Predicated region
    $region54: #{decoder_step.1} parent=1 // pred_check
      _
    $region55: #{decoder_step.1} parent=1 // pred_check_branch
      %102 = sbr.rel (0) target = $region57
    $region56: #{decoder_step.1} parent=1 // pred_region
      %103 = dma.done [#allocation9], 1024
    $region57: #{decoder_step.1} parent=1 // pred_fallthru
      _
    %v105 = vld [vmem:[%s0] sm:$0xff]
    %v106 = vlaneseq
    %v107 = vand.u32 %v106, 127
    %108 = vset.pattern.permute.xlu0 0
    %109 = vperm.xlu0 %108, %v105
    %v110 = vpop.permute.xlu0 %109
    %vm111 = vcmp.eq.s32.totalorder %v107, %v110
    %v112 = vsel %vm111, 1, 0
    %v113 = vcvt.s32.f32 %v112
    %v114 = vpack.c.bf16 %v113, %v113
    %v115 = vld [vmem:[#allocation5] sm:$0xf]
    %v116 = vld [vmem:[#allocation5 + $0x4] sm:$0xf]
    %v117 = vld [vmem:[#allocation5 + $0x8] sm:$0xf]
    %v118 = vld [vmem:[#allocation5 + $0xc] sm:$0xf]
    %v119 = vld [vmem:[#allocation5 + $0x10] sm:$0xf]
    %v120 = vld [vmem:[#allocation5 + $0x14] sm:$0xf]
    %v121 = vld [vmem:[#allocation5 + $0x18] sm:$0xf]
    %v122 = vld [vmem:[#allocation5 + $0x1c] sm:$0xf]
    %v123 = vld [vmem:[#allocation5 + $0x20] sm:$0xf]
    %v124 = vld [vmem:[#allocation5 + $0x24] sm:$0xf]
    %v125 = vld [vmem:[#allocation5 + $0x28] sm:$0xf]
    %v126 = vld [vmem:[#allocation5 + $0x2c] sm:$0xf]
    %v127 = vld [vmem:[#allocation5 + $0x30] sm:$0xf]
    %v128 = vld [vmem:[#allocation5 + $0x34] sm:$0xf]
    %v129 = vld [vmem:[#allocation5 + $0x38] sm:$0xf]
    %v130 = vld [vmem:[#allocation5 + $0x3c] sm:$0xf]
    %v147 = vunpack.c.l.b16 %v115
    %v148 = vunpack.c.l.b16 %v116
    %v149 = vunpack.c.l.b16 %v117
    %v150 = vunpack.c.l.b16 %v118
    %v151 = vunpack.c.l.b16 %v119
    %v152 = vunpack.c.l.b16 %v120
    %v153 = vunpack.c.l.b16 %v121
    %v154 = vunpack.c.l.b16 %v122
    %v155 = vunpack.c.l.b16 %v123
    %v156 = vunpack.c.l.b16 %v124
    %v157 = vunpack.c.l.b16 %v125
    %v158 = vunpack.c.l.b16 %v126
    %v159 = vunpack.c.l.b16 %v127
    %v160 = vunpack.c.l.b16 %v128
    %v161 = vunpack.c.l.b16 %v129
    %v162 = vunpack.c.l.b16 %v130
    %v163 = vpack.c.b16 %v148, %v147
    %v164 = vpack.c.b16 %v150, %v149
    %v165 = vpack.c.b16 %v152, %v151
    %v166 = vpack.c.b16 %v154, %v153
    %v167 = vpack.c.b16 %v156, %v155
    %v168 = vpack.c.b16 %v158, %v157
    %v169 = vpack.c.b16 %v160, %v159
    %v170 = vpack.c.b16 %v162, %v161
    %179 = vmatprep.subr.bf16.mxu0 0
    %180 = vmatpush1.bf16.msra.mxu0 %v163
    %181 = vmatprep.subr.bf16.mxu0 0
    %182 = vmatpush1.bf16.msra.mxu0 %v164
    %183 = vmatprep.subr.bf16.mxu0 0
    %184 = vmatpush1.bf16.msra.mxu0 %v165
    %185 = vmatprep.subr.bf16.mxu0 0
    %186 = vmatpush1.bf16.msra.mxu0 %v166
    %187 = vmatprep.subr.bf16.mxu0 0
    %188 = vmatpush1.bf16.msra.mxu0 %v167
    %189 = vmatprep.subr.bf16.mxu0 0
    %190 = vmatpush1.bf16.msra.mxu0 %v168
    %191 = vmatprep.subr.bf16.mxu0 0
    %192 = vmatpush1.bf16.msra.mxu0 %v169
    %193 = vmatprep.subr.bf16.mxu0 0
    %194 = vmatpush1.bf16.msra.mxu0 %v170
    %195 = vmatprep.subr.bf16.mxu0 0
    %196 = vmatpush1.bf16.msra.mxu0 0
    %197 = vmatprep.subr.bf16.mxu0 0
    %198 = vmatpush1.bf16.msra.mxu0 0
    %199 = vmatprep.subr.bf16.mxu0 0
    %200 = vmatpush1.bf16.msra.mxu0 0
    %201 = vmatprep.subr.bf16.mxu0 0
    %202 = vmatpush1.bf16.msra.mxu0 0
    %203 = vmatprep.subr.bf16.mxu0 0
    %204 = vmatpush1.bf16.msra.mxu0 0
    %205 = vmatprep.subr.bf16.mxu0 0
    %206 = vmatpush1.bf16.msra.mxu0 0
    %207 = vmatprep.subr.bf16.mxu0 0
    %208 = vmatpush1.bf16.msra.mxu0 0
    %209 = vmatprep.subr.bf16.mxu0 0
    %210 = vmatpush1.bf16.msra.mxu0 0
    %211 = vmatprep.mubr.bf16.mxu0 0
    %212 = vmatmul.mubr.bf16.gmra.mrb[0].mxu0 %v114
    %v213 = vpop.f32.mrb[0].mxu0
    %v214 = vadd.f32 0.0, %v213
    %v215 = vpop.f32.mrb[0].mxu0
    %v216 = vpop.f32.mrb[0].mxu0
    %v217 = vpop.f32.mrb[0].mxu0
    %218 = vdwg.mxu0
    %v219 = vld [vmem:[#allocation2] sm:$0xff]
    %v220 = vpack.c.bf16 %v214, %v214
    %v221 = vld [vmem:[#allocation7] sm:$0xf]
    %v222 = vld [vmem:[#allocation7 + $0x4] sm:$0xf]
    %v223 = vld [vmem:[#allocation7 + $0x8] sm:$0xf]
    %v224 = vld [vmem:[#allocation7 + $0xc] sm:$0xf]
    %v225 = vld [vmem:[#allocation7 + $0x10] sm:$0xf]
    %v226 = vld [vmem:[#allocation7 + $0x14] sm:$0xf]
    %v227 = vld [vmem:[#allocation7 + $0x18] sm:$0xf]
    %v228 = vld [vmem:[#allocation7 + $0x1c] sm:$0xf]
    %v229 = vld [vmem:[#allocation7 + $0x20] sm:$0xf]
    %v230 = vld [vmem:[#allocation7 + $0x24] sm:$0xf]
    %v231 = vld [vmem:[#allocation7 + $0x28] sm:$0xf]
    %v232 = vld [vmem:[#allocation7 + $0x2c] sm:$0xf]
    %v233 = vld [vmem:[#allocation7 + $0x30] sm:$0xf]
    %v234 = vld [vmem:[#allocation7 + $0x34] sm:$0xf]
    %v235 = vld [vmem:[#allocation7 + $0x38] sm:$0xf]
    %v236 = vld [vmem:[#allocation7 + $0x3c] sm:$0xf]
    %v237 = vld [vmem:[%s5] sm:$0x1]
    %v239 = vlaneseq
    %v240 = vshrl.u32 %v239, 7
    %v241 = vsub.s32 0, %v240
    %v242 = vrot.slane %v237, %v241
    %v260 = vunpack.c.l.b16 %v221
    %v261 = vunpack.c.l.b16 %v222
    %v262 = vunpack.c.l.b16 %v223
    %v263 = vunpack.c.l.b16 %v224
    %v264 = vunpack.c.l.b16 %v225
    %v265 = vunpack.c.l.b16 %v226
    %v266 = vunpack.c.l.b16 %v227
    %v267 = vunpack.c.l.b16 %v228
    %v268 = vunpack.c.l.b16 %v229
    %v269 = vunpack.c.l.b16 %v230
    %v270 = vunpack.c.l.b16 %v231
    %v271 = vunpack.c.l.b16 %v232
    %v272 = vunpack.c.l.b16 %v233
    %v273 = vunpack.c.l.b16 %v234
    %v274 = vunpack.c.l.b16 %v235
    %v275 = vunpack.c.l.b16 %v236
    %v276 = vpack.c.b16 %v261, %v260
    %v277 = vpack.c.b16 %v263, %v262
    %v278 = vpack.c.b16 %v265, %v264
    %v279 = vpack.c.b16 %v267, %v266
    %v280 = vpack.c.b16 %v269, %v268
    %v281 = vpack.c.b16 %v271, %v270
    %v282 = vpack.c.b16 %v273, %v272
    %v283 = vpack.c.b16 %v275, %v274
    %292 = vmatprep.subr.bf16.mxu0 0
    %293 = vmatpush1.bf16.msra.mxu0 %v276
    %294 = vmatprep.subr.bf16.mxu0 0
    %295 = vmatpush1.bf16.msra.mxu0 %v277
    %296 = vmatprep.subr.bf16.mxu0 0
    %297 = vmatpush1.bf16.msra.mxu0 %v278
    %298 = vmatprep.subr.bf16.mxu0 0
    %299 = vmatpush1.bf16.msra.mxu0 %v279
    %300 = vmatprep.subr.bf16.mxu0 0
    %301 = vmatpush1.bf16.msra.mxu0 %v280
    %302 = vmatprep.subr.bf16.mxu0 0
    %303 = vmatpush1.bf16.msra.mxu0 %v281
    %304 = vmatprep.subr.bf16.mxu0 0
    %305 = vmatpush1.bf16.msra.mxu0 %v282
    %306 = vmatprep.subr.bf16.mxu0 0
    %307 = vmatpush1.bf16.msra.mxu0 %v283
    %308 = vmatprep.subr.bf16.mxu0 0
    %309 = vmatpush1.bf16.msra.mxu0 0
    %310 = vmatprep.subr.bf16.mxu0 0
    %311 = vmatpush1.bf16.msra.mxu0 0
    %312 = vmatprep.subr.bf16.mxu0 0
    %313 = vmatpush1.bf16.msra.mxu0 0
    %314 = vmatprep.subr.bf16.mxu0 0
    %315 = vmatpush1.bf16.msra.mxu0 0
    %316 = vmatprep.subr.bf16.mxu0 0
    %317 = vmatpush1.bf16.msra.mxu0 0
    %318 = vmatprep.subr.bf16.mxu0 0
    %319 = vmatpush1.bf16.msra.mxu0 0
    %320 = vmatprep.subr.bf16.mxu0 0
    %321 = vmatpush1.bf16.msra.mxu0 0
    %322 = vmatprep.subr.bf16.mxu0 0
    %323 = vmatpush1.bf16.msra.mxu0 0
    %324 = vmatprep.mubr.bf16.mxu0 0
    %325 = vmatmul.mubr.bf16.gmra.mrb[0].mxu0 %v220
    %v326 = vpop.f32.mrb[0].mxu0
    %v327 = vadd.f32 %v242, %v326
    %v328 = vpop.f32.mrb[0].mxu0
    %v329 = vpop.f32.mrb[0].mxu0
    %v330 = vpop.f32.mrb[0].mxu0
    %331 = vdwg.mxu0
    %v332 = vpack.c.bf16 %v219, %v219
    %v333 = vld [vmem:[#allocation8] sm:$0xf]
    %v334 = vld [vmem:[#allocation8 + $0x4] sm:$0xf]
    %v335 = vld [vmem:[#allocation8 + $0x8] sm:$0xf]
    %v336 = vld [vmem:[#allocation8 + $0xc] sm:$0xf]
    %v337 = vld [vmem:[#allocation8 + $0x10] sm:$0xf]
    %v338 = vld [vmem:[#allocation8 + $0x14] sm:$0xf]
    %v339 = vld [vmem:[#allocation8 + $0x18] sm:$0xf]
    %v340 = vld [vmem:[#allocation8 + $0x1c] sm:$0xf]
    %v341 = vld [vmem:[#allocation8 + $0x20] sm:$0xf]
    %v342 = vld [vmem:[#allocation8 + $0x24] sm:$0xf]
    %v343 = vld [vmem:[#allocation8 + $0x28] sm:$0xf]
    %v344 = vld [vmem:[#allocation8 + $0x2c] sm:$0xf]
    %v345 = vld [vmem:[#allocation8 + $0x30] sm:$0xf]
    %v346 = vld [vmem:[#allocation8 + $0x34] sm:$0xf]
    %v347 = vld [vmem:[#allocation8 + $0x38] sm:$0xf]
    %v348 = vld [vmem:[#allocation8 + $0x3c] sm:$0xf]
    %v365 = vunpack.c.l.b16 %v333
    %v366 = vunpack.c.l.b16 %v334
    %v367 = vunpack.c.l.b16 %v335
    %v368 = vunpack.c.l.b16 %v336
    %v369 = vunpack.c.l.b16 %v337
    %v370 = vunpack.c.l.b16 %v338
    %v371 = vunpack.c.l.b16 %v339
    %v372 = vunpack.c.l.b16 %v340
    %v373 = vunpack.c.l.b16 %v341
    %v374 = vunpack.c.l.b16 %v342
    %v375 = vunpack.c.l.b16 %v343
    %v376 = vunpack.c.l.b16 %v344
    %v377 = vunpack.c.l.b16 %v345
    %v378 = vunpack.c.l.b16 %v346
    %v379 = vunpack.c.l.b16 %v347
    %v380 = vunpack.c.l.b16 %v348
    %v381 = vpack.c.b16 %v366, %v365
    %v382 = vpack.c.b16 %v368, %v367
    %v383 = vpack.c.b16 %v370, %v369
    %v384 = vpack.c.b16 %v372, %v371
    %v385 = vpack.c.b16 %v374, %v373
    %v386 = vpack.c.b16 %v376, %v375
    %v387 = vpack.c.b16 %v378, %v377
    %v388 = vpack.c.b16 %v380, %v379
    %397 = vmatprep.subr.bf16.mxu0 0
    %398 = vmatpush1.bf16.msra.mxu0 %v381
    %399 = vmatprep.subr.bf16.mxu0 0
    %400 = vmatpush1.bf16.msra.mxu0 %v382
    %401 = vmatprep.subr.bf16.mxu0 0
    %402 = vmatpush1.bf16.msra.mxu0 %v383
    %403 = vmatprep.subr.bf16.mxu0 0
    %404 = vmatpush1.bf16.msra.mxu0 %v384
    %405 = vmatprep.subr.bf16.mxu0 0
    %406 = vmatpush1.bf16.msra.mxu0 %v385
    %407 = vmatprep.subr.bf16.mxu0 0
    %408 = vmatpush1.bf16.msra.mxu0 %v386
    %409 = vmatprep.subr.bf16.mxu0 0
    %410 = vmatpush1.bf16.msra.mxu0 %v387
    %411 = vmatprep.subr.bf16.mxu0 0
    %412 = vmatpush1.bf16.msra.mxu0 %v388
    %413 = vmatprep.subr.bf16.mxu0 0
    %414 = vmatpush1.bf16.msra.mxu0 0
    %415 = vmatprep.subr.bf16.mxu0 0
    %416 = vmatpush1.bf16.msra.mxu0 0
    %417 = vmatprep.subr.bf16.mxu0 0
    %418 = vmatpush1.bf16.msra.mxu0 0
    %419 = vmatprep.subr.bf16.mxu0 0
    %420 = vmatpush1.bf16.msra.mxu0 0
    %421 = vmatprep.subr.bf16.mxu0 0
    %422 = vmatpush1.bf16.msra.mxu0 0
    %423 = vmatprep.subr.bf16.mxu0 0
    %424 = vmatpush1.bf16.msra.mxu0 0
    %425 = vmatprep.subr.bf16.mxu0 0
    %426 = vmatpush1.bf16.msra.mxu0 0
    %427 = vmatprep.subr.bf16.mxu0 0
    %428 = vmatpush1.bf16.msra.mxu0 0
    %429 = vmatprep.mubr.bf16.mxu0 0
    %430 = vmatmul.mubr.bf16.gmra.mrb[0].mxu0 %v332
    %v431 = vpop.f32.mrb[0].mxu0
    %v432 = vadd.f32 0.0, %v431
    %v433 = vpop.f32.mrb[0].mxu0
    %v434 = vpop.f32.mrb[0].mxu0
    %v435 = vpop.f32.mrb[0].mxu0
    %436 = vdwg.mxu0
    %v437 = vadd.f32 %v327, %v432
    %v438 = vxor.u32 %v437, 2147483648
    %v439 = vmul.f32 %v438, 1.442695
    %v440 = vpow.pop %v439
    %v441 = vadd.f32 %v440, 1.0
    %v442 = vrcp.pop %v441
    %v443 = vmul.f32 1.0, %v442
    %v444 = vld [vmem:[%s6] sm:$0x1]
    %v446 = vlaneseq
    %v447 = vshrl.u32 %v446, 7
    %v448 = vsub.s32 0, %v447
    %v449 = vrot.slane %v444, %v448
    %450 = vrot.lane.b32.xlu0 %v449, 64
    %v451 = vpop.permute.xlu0 %450
    %v453 = vadd.f32 %v432, %v451
    %455 = vrot.lane.b32.xlu0 %v453, 64
    %v456 = vpop.permute.xlu0 %455
    %v458 = vmul.f32 %v443, %v456
    %460 = vrot.lane.b32.xlu0 %v458, 64
    %v461 = vpop.permute.xlu0 %460
    %v463 = vadd.f32 %v327, %v461
    %v464 = vtanh.pop %v463
    %v465 = vsub.f32 1.0, %v443
    %467 = vrot.lane.b32.xlu0 %v464, 96
    %v468 = vpop.permute.xlu0 %467
    %v470 = vmul.f32 %v465, %v468
    %472 = vrot.lane.b32.xlu0 %v219, 32
    %v473 = vpop.permute.xlu0 %472
    %v475 = vmul.f32 %v443, %v473
    %v476 = vadd.f32 %v470, %v475
    %478 = vrot.lane.b32.xlu0 %v476, 96
    %v479 = vpop.permute.xlu0 %478
    %vm481 = vcmask 261120
    %v482 = vsel %vm481, %v479, 0.0
    %483 = vst [vmem:[#allocation12] sm:$0xff] %v482
    %s484 = scalar_lea.vmem [#allocation2], 8
    %v485 = vld [vmem:[%s484] sm:$0xff]
    %v486 = vpack.c.bf16 %v482, %v482
    %s487 = scalar_lea.vmem [#allocation7], 64
    %v488 = vld [vmem:[%s487] sm:$0xf]
    %v489 = vld [vmem:[%s487 + $0x4] sm:$0xf]
    %v490 = vld [vmem:[%s487 + $0x8] sm:$0xf]
    %v491 = vld [vmem:[%s487 + $0xc] sm:$0xf]
    %v492 = vld [vmem:[%s487 + $0x10] sm:$0xf]
    %v493 = vld [vmem:[%s487 + $0x14] sm:$0xf]
    %v494 = vld [vmem:[%s487 + $0x18] sm:$0xf]
    %v495 = vld [vmem:[%s487 + $0x1c] sm:$0xf]
    %v496 = vld [vmem:[%s487 + $0x20] sm:$0xf]
    %v497 = vld [vmem:[%s487 + $0x24] sm:$0xf]
    %v498 = vld [vmem:[%s487 + $0x28] sm:$0xf]
    %v499 = vld [vmem:[%s487 + $0x2c] sm:$0xf]
    %v500 = vld [vmem:[%s487 + $0x30] sm:$0xf]
    %v501 = vld [vmem:[%s487 + $0x34] sm:$0xf]
    %v502 = vld [vmem:[%s487 + $0x38] sm:$0xf]
    %v503 = vld [vmem:[%s487 + $0x3c] sm:$0xf]
    %s504 = scalar_lea.vmem %s5, 1
    %v505 = vld [vmem:[%s504] sm:$0x1]
    %v507 = vlaneseq
    %v508 = vshrl.u32 %v507, 7
    %v509 = vsub.s32 0, %v508
    %v510 = vrot.slane %v505, %v509
    %v528 = vunpack.c.l.b16 %v488
    %v529 = vunpack.c.l.b16 %v489
    %v530 = vunpack.c.l.b16 %v490
    %v531 = vunpack.c.l.b16 %v491
    %v532 = vunpack.c.l.b16 %v492
    %v533 = vunpack.c.l.b16 %v493
    %v534 = vunpack.c.l.b16 %v494
    %v535 = vunpack.c.l.b16 %v495
    %v536 = vunpack.c.l.b16 %v496
    %v537 = vunpack.c.l.b16 %v497
    %v538 = vunpack.c.l.b16 %v498
    %v539 = vunpack.c.l.b16 %v499
    %v540 = vunpack.c.l.b16 %v500
    %v541 = vunpack.c.l.b16 %v501
    %v542 = vunpack.c.l.b16 %v502
    %v543 = vunpack.c.l.b16 %v503
    %v544 = vpack.c.b16 %v529, %v528
    %v545 = vpack.c.b16 %v531, %v530
    %v546 = vpack.c.b16 %v533, %v532
    %v547 = vpack.c.b16 %v535, %v534
    %v548 = vpack.c.b16 %v537, %v536
    %v549 = vpack.c.b16 %v539, %v538
    %v550 = vpack.c.b16 %v541, %v540
    %v551 = vpack.c.b16 %v543, %v542
    %560 = vmatprep.subr.bf16.mxu0 0
    %561 = vmatpush1.bf16.msra.mxu0 %v544
    %562 = vmatprep.subr.bf16.mxu0 0
    %563 = vmatpush1.bf16.msra.mxu0 %v545
    %564 = vmatprep.subr.bf16.mxu0 0
    %565 = vmatpush1.bf16.msra.mxu0 %v546
    %566 = vmatprep.subr.bf16.mxu0 0
    %567 = vmatpush1.bf16.msra.mxu0 %v547
    %568 = vmatprep.subr.bf16.mxu0 0
    %569 = vmatpush1.bf16.msra.mxu0 %v548
    %570 = vmatprep.subr.bf16.mxu0 0
    %571 = vmatpush1.bf16.msra.mxu0 %v549
    %572 = vmatprep.subr.bf16.mxu0 0
    %573 = vmatpush1.bf16.msra.mxu0 %v550
    %574 = vmatprep.subr.bf16.mxu0 0
    %575 = vmatpush1.bf16.msra.mxu0 %v551
    %576 = vmatprep.subr.bf16.mxu0 0
    %577 = vmatpush1.bf16.msra.mxu0 0
    %578 = vmatprep.subr.bf16.mxu0 0
    %579 = vmatpush1.bf16.msra.mxu0 0
    %580 = vmatprep.subr.bf16.mxu0 0
    %581 = vmatpush1.bf16.msra.mxu0 0
    %582 = vmatprep.subr.bf16.mxu0 0
    %583 = vmatpush1.bf16.msra.mxu0 0
    %584 = vmatprep.subr.bf16.mxu0 0
    %585 = vmatpush1.bf16.msra.mxu0 0
    %586 = vmatprep.subr.bf16.mxu0 0
    %587 = vmatpush1.bf16.msra.mxu0 0
    %588 = vmatprep.subr.bf16.mxu0 0
    %589 = vmatpush1.bf16.msra.mxu0 0
    %590 = vmatprep.subr.bf16.mxu0 0
    %591 = vmatpush1.bf16.msra.mxu0 0
    %592 = vmatprep.mubr.bf16.mxu0 0
    %593 = vmatmul.mubr.bf16.gmra.mrb[0].mxu0 %v486
    %v594 = vpop.f32.mrb[0].mxu0
    %v595 = vadd.f32 %v510, %v594
    %v596 = vpop.f32.mrb[0].mxu0
    %v597 = vpop.f32.mrb[0].mxu0
    %v598 = vpop.f32.mrb[0].mxu0
    %599 = vdwg.mxu0
    %v600 = vpack.c.bf16 %v485, %v485
    %s601 = scalar_lea.vmem [#allocation8], 64
    %v602 = vld [vmem:[%s601] sm:$0xf]
    %v603 = vld [vmem:[%s601 + $0x4] sm:$0xf]
    %v604 = vld [vmem:[%s601 + $0x8] sm:$0xf]
    %v605 = vld [vmem:[%s601 + $0xc] sm:$0xf]
    %v606 = vld [vmem:[%s601 + $0x10] sm:$0xf]
    %v607 = vld [vmem:[%s601 + $0x14] sm:$0xf]
    %v608 = vld [vmem:[%s601 + $0x18] sm:$0xf]
    %v609 = vld [vmem:[%s601 + $0x1c] sm:$0xf]
    %v610 = vld [vmem:[%s601 + $0x20] sm:$0xf]
    %v611 = vld [vmem:[%s601 + $0x24] sm:$0xf]
    %v612 = vld [vmem:[%s601 + $0x28] sm:$0xf]
    %v613 = vld [vmem:[%s601 + $0x2c] sm:$0xf]
    %v614 = vld [vmem:[%s601 + $0x30] sm:$0xf]
    %v615 = vld [vmem:[%s601 + $0x34] sm:$0xf]
    %v616 = vld [vmem:[%s601 + $0x38] sm:$0xf]
    %v617 = vld [vmem:[%s601 + $0x3c] sm:$0xf]
    %v634 = vunpack.c.l.b16 %v602
    %v635 = vunpack.c.l.b16 %v603
    %v636 = vunpack.c.l.b16 %v604
    %v637 = vunpack.c.l.b16 %v605
    %v638 = vunpack.c.l.b16 %v606
    %v639 = vunpack.c.l.b16 %v607
    %v640 = vunpack.c.l.b16 %v608
    %v641 = vunpack.c.l.b16 %v609
    %v642 = vunpack.c.l.b16 %v610
    %v643 = vunpack.c.l.b16 %v611
    %v644 = vunpack.c.l.b16 %v612
    %v645 = vunpack.c.l.b16 %v613
    %v646 = vunpack.c.l.b16 %v614
    %v647 = vunpack.c.l.b16 %v615
    %v648 = vunpack.c.l.b16 %v616
    %v649 = vunpack.c.l.b16 %v617
    %v650 = vpack.c.b16 %v635, %v634
    %v651 = vpack.c.b16 %v637, %v636
    %v652 = vpack.c.b16 %v639, %v638
    %v653 = vpack.c.b16 %v641, %v640
    %v654 = vpack.c.b16 %v643, %v642
    %v655 = vpack.c.b16 %v645, %v644
    %v656 = vpack.c.b16 %v647, %v646
    %v657 = vpack.c.b16 %v649, %v648
    %666 = vmatprep.subr.bf16.mxu0 0
    %667 = vmatpush1.bf16.msra.mxu0 %v650
    %668 = vmatprep.subr.bf16.mxu0 0
    %669 = vmatpush1.bf16.msra.mxu0 %v651
    %670 = vmatprep.subr.bf16.mxu0 0
    %671 = vmatpush1.bf16.msra.mxu0 %v652
    %672 = vmatprep.subr.bf16.mxu0 0
    %673 = vmatpush1.bf16.msra.mxu0 %v653
    %674 = vmatprep.subr.bf16.mxu0 0
    %675 = vmatpush1.bf16.msra.mxu0 %v654
    %676 = vmatprep.subr.bf16.mxu0 0
    %677 = vmatpush1.bf16.msra.mxu0 %v655
    %678 = vmatprep.subr.bf16.mxu0 0
    %679 = vmatpush1.bf16.msra.mxu0 %v656
    %680 = vmatprep.subr.bf16.mxu0 0
    %681 = vmatpush1.bf16.msra.mxu0 %v657
    %682 = vmatprep.subr.bf16.mxu0 0
    %683 = vmatpush1.bf16.msra.mxu0 0
    %684 = vmatprep.subr.bf16.mxu0 0
    %685 = vmatpush1.bf16.msra.mxu0 0
    %686 = vmatprep.subr.bf16.mxu0 0
    %687 = vmatpush1.bf16.msra.mxu0 0
    %688 = vmatprep.subr.bf16.mxu0 0
    %689 = vmatpush1.bf16.msra.mxu0 0
    %690 = vmatprep.subr.bf16.mxu0 0
    %691 = vmatpush1.bf16.msra.mxu0 0
    %692 = vmatprep.subr.bf16.mxu0 0
    %693 = vmatpush1.bf16.msra.mxu0 0
    %694 = vmatprep.subr.bf16.mxu0 0
    %695 = vmatpush1.bf16.msra.mxu0 0
    %696 = vmatprep.subr.bf16.mxu0 0
    %697 = vmatpush1.bf16.msra.mxu0 0
    %698 = vmatprep.mubr.bf16.mxu0 0
    %699 = vmatmul.mubr.bf16.gmra.mrb[0].mxu0 %v600
    %v700 = vpop.f32.mrb[0].mxu0
    %v701 = vadd.f32 0.0, %v700
    %v702 = vpop.f32.mrb[0].mxu0
    %v703 = vpop.f32.mrb[0].mxu0
    %v704 = vpop.f32.mrb[0].mxu0
    %705 = vdwg.mxu0
    %v706 = vadd.f32 %v595, %v701
    %v707 = vxor.u32 %v706, 2147483648
    %v708 = vmul.f32 %v707, 1.442695
    %v709 = vpow.pop %v708
    %v710 = vadd.f32 %v709, 1.0
    %v711 = vrcp.pop %v710
    %v712 = vmul.f32 1.0, %v711
    %s713 = scalar_lea.vmem %s6, 1
    %v714 = vld [vmem:[%s713] sm:$0x1]
    %v716 = vlaneseq
    %v717 = vshrl.u32 %v716, 7
    %v718 = vsub.s32 0, %v717
    %v719 = vrot.slane %v714, %v718
    %720 = vrot.lane.b32.xlu0 %v719, 64
    %v721 = vpop.permute.xlu0 %720
    %v723 = vadd.f32 %v701, %v721
    %725 = vrot.lane.b32.xlu0 %v723, 64
    %v726 = vpop.permute.xlu0 %725
    %v728 = vmul.f32 %v712, %v726
    %730 = vrot.lane.b32.xlu0 %v728, 64
    %v731 = vpop.permute.xlu0 %730
    %v733 = vadd.f32 %v595, %v731
    %v734 = vtanh.pop %v733
    %v735 = vsub.f32 1.0, %v712
    %737 = vrot.lane.b32.xlu0 %v734, 96
    %v738 = vpop.permute.xlu0 %737
    %v740 = vmul.f32 %v735, %v738
    %742 = vrot.lane.b32.xlu0 %v485, 32
    %v743 = vpop.permute.xlu0 %742
    %v745 = vmul.f32 %v712, %v743
    %v746 = vadd.f32 %v740, %v745
    %748 = vrot.lane.b32.xlu0 %v746, 96
    %v749 = vpop.permute.xlu0 %748
    %v751 = vsel %vm481, %v749, 0.0
    %s752 = scalar_lea.vmem [#allocation12], 8
    %753 = vst [vmem:[%s752] sm:$0xff] %v751
    %v754 = vpack.c.bf16 %v751, %v751
    %v755 = vld [vmem:[#allocation10] sm:$0xf]
    %v756 = vld [vmem:[#allocation10 + $0x4] sm:$0xf]
    %v757 = vld [vmem:[#allocation10 + $0x8] sm:$0xf]
    %v758 = vld [vmem:[#allocation10 + $0xc] sm:$0xf]
    %v759 = vld [vmem:[#allocation10 + $0x10] sm:$0xf]
    %v760 = vld [vmem:[#allocation10 + $0x14] sm:$0xf]
    %v761 = vld [vmem:[#allocation10 + $0x18] sm:$0xf]
    %v762 = vld [vmem:[#allocation10 + $0x1c] sm:$0xf]
    %v763 = vld [vmem:[#allocation10 + $0x20] sm:$0xf]
    %v764 = vld [vmem:[#allocation10 + $0x24] sm:$0xf]
    %v765 = vld [vmem:[#allocation10 + $0x28] sm:$0xf]
    %v766 = vld [vmem:[#allocation10 + $0x2c] sm:$0xf]
    %v767 = vld [vmem:[#allocation10 + $0x30] sm:$0xf]
    %v768 = vld [vmem:[#allocation10 + $0x34] sm:$0xf]
    %v769 = vld [vmem:[#allocation10 + $0x38] sm:$0xf]
    %v770 = vld [vmem:[#allocation10 + $0x3c] sm:$0xf]
    %v771 = vld [vmem:[%s8] sm:$0x1]
    %v773 = vlaneseq
    %v774 = vshrl.u32 %v773, 7
    %v775 = vsub.s32 0, %v774
    %v776 = vrot.slane %v771, %v775
    %v794 = vunpack.c.l.b16 %v755
    %v795 = vunpack.c.l.b16 %v756
    %v796 = vunpack.c.l.b16 %v757
    %v797 = vunpack.c.l.b16 %v758
    %v798 = vunpack.c.l.b16 %v759
    %v799 = vunpack.c.l.b16 %v760
    %v800 = vunpack.c.l.b16 %v761
    %v801 = vunpack.c.l.b16 %v762
    %v802 = vunpack.c.l.b16 %v763
    %v803 = vunpack.c.l.b16 %v764
    %v804 = vunpack.c.l.b16 %v765
    %v805 = vunpack.c.l.b16 %v766
    %v806 = vunpack.c.l.b16 %v767
    %v807 = vunpack.c.l.b16 %v768
    %v808 = vunpack.c.l.b16 %v769
    %v809 = vunpack.c.l.b16 %v770
    %v810 = vpack.c.b16 %v795, %v794
    %v811 = vpack.c.b16 %v797, %v796
    %v812 = vpack.c.b16 %v799, %v798
    %v813 = vpack.c.b16 %v801, %v800
    %v814 = vpack.c.b16 %v803, %v802
    %v815 = vpack.c.b16 %v805, %v804
    %v816 = vpack.c.b16 %v807, %v806
    %v817 = vpack.c.b16 %v809, %v808
    %826 = vmatprep.subr.bf16.mxu0 0
    %827 = vmatpush1.bf16.msra.mxu0 %v810
    %828 = vmatprep.subr.bf16.mxu0 0
    %829 = vmatpush1.bf16.msra.mxu0 %v811
    %830 = vmatprep.subr.bf16.mxu0 0
    %831 = vmatpush1.bf16.msra.mxu0 %v812
    %832 = vmatprep.subr.bf16.mxu0 0
    %833 = vmatpush1.bf16.msra.mxu0 %v813
    %834 = vmatprep.subr.bf16.mxu0 0
    %835 = vmatpush1.bf16.msra.mxu0 %v814
    %836 = vmatprep.subr.bf16.mxu0 0
    %837 = vmatpush1.bf16.msra.mxu0 %v815
    %838 = vmatprep.subr.bf16.mxu0 0
    %839 = vmatpush1.bf16.msra.mxu0 %v816
    %840 = vmatprep.subr.bf16.mxu0 0
    %841 = vmatpush1.bf16.msra.mxu0 %v817
    %842 = vmatprep.subr.bf16.mxu0 0
    %843 = vmatpush1.bf16.msra.mxu0 0
    %844 = vmatprep.subr.bf16.mxu0 0
    %845 = vmatpush1.bf16.msra.mxu0 0
    %846 = vmatprep.subr.bf16.mxu0 0
    %847 = vmatpush1.bf16.msra.mxu0 0
    %848 = vmatprep.subr.bf16.mxu0 0
    %849 = vmatpush1.bf16.msra.mxu0 0
    %850 = vmatprep.subr.bf16.mxu0 0
    %851 = vmatpush1.bf16.msra.mxu0 0
    %852 = vmatprep.subr.bf16.mxu0 0
    %853 = vmatpush1.bf16.msra.mxu0 0
    %854 = vmatprep.subr.bf16.mxu0 0
    %855 = vmatpush1.bf16.msra.mxu0 0
    %856 = vmatprep.subr.bf16.mxu0 0
    %857 = vmatpush1.bf16.msra.mxu0 0
    %858 = vmatprep.mubr.bf16.mxu0 0
    %859 = vmatmul.mubr.bf16.gmra.mrb[0].mxu0 %v754
    %v860 = vpop.f32.mrb[0].mxu0
    %v861 = vadd.f32 %v776, %v860
    %v862 = vpop.f32.mrb[0].mxu0
    %v863 = vpop.f32.mrb[0].mxu0
    %v864 = vpop.f32.mrb[0].mxu0
    %865 = vdwg.mxu0
    %866 = vst [vmem:[#allocation11] sm:$0xff] %v861
    // Predicated region
    $region58: #{decoder_step.1} parent=1 // pred_check
      _
    $region59: #{decoder_step.1} parent=1 // pred_check_branch
      %868 = sbr.rel (0) target = $region61
    $region60: #{decoder_step.1} parent=1 // pred_region
      %s870 = ssub.s32 128, 128
      %871 = vsyncadd [#allocation4], %s870
      %s873 = sshll.u32 [#allocation11], 4
      %s874 = int_to_ptr.vmem [resolvable:$true] %s873
      %876 = dma.vmem_to_hbm [thread:$0]  %s874, 128, %s9, [#allocation4]
    $region61: #{decoder_step.1} parent=1 // pred_fallthru
      _
    // Predicated region
    $region62: #{decoder_step.1} parent=1 // pred_check
      _
    $region63: #{decoder_step.1} parent=1 // pred_check_branch
      %878 = sbr.rel (0) target = $region65
    $region64: #{decoder_step.1} parent=1 // pred_region
      %s880 = ssub.s32 256, 256
      %881 = vsyncadd [#allocation13], %s880
      %s882 = sshll.u32 [#allocation12], 4
      %s883 = int_to_ptr.vmem [resolvable:$true] %s882
      %888 = dma.vmem_to_hbm [thread:$0]  %s883, 256, %s10, [#allocation13], 128, 128, 8
    $region65: #{decoder_step.1} parent=1 // pred_fallthru
      _
    // Predicated region
    $region66: #{decoder_step.1} parent=1 // pred_check
      _
    $region67: #{decoder_step.1} parent=1 // pred_check_branch
      %890 = sbr.rel (0) target = $region69
    $region68: #{decoder_step.1} parent=1 // pred_region
      %891 = dma.done [#allocation4], 128
    $region69: #{decoder_step.1} parent=1 // pred_fallthru
      _
    // Predicated region
    $region70: #{decoder_step.1} parent=1 // pred_check
      _
    $region71: #{decoder_step.1} parent=1 // pred_check_branch
      %893 = sbr.rel (0) target = $region73
    $region72: #{decoder_step.1} parent=1 // pred_region
      %894 = dma.done [#allocation13], 256
    $region73: #{decoder_step.1} parent=1 // pred_fallthru
      _
    %895 = vsyncpa [#allocation3], 1
    %896 = vsyncpa [#allocation6], 1
    %897 = vsyncpa [#allocation9], 1
    %898 = vsyncpa [#allocation4], 1
    %899 = vsyncpa [#allocation13], 1

</llo_original>
